<compile_context>
chip_gen: v5e
topology: v5e:2x2
jax: 0.10.0
libtpu: 0.0.40
codegen_flags: <defaults>
</compile_context>

<pallas_src>
import math

import jax
import jax.numpy as jnp
from jax.experimental import pallas as pl
from jax.experimental.pallas import tpu as pltpu


def _normalize_kernel(x_ref, o_ref):
    # uint8 -> f32 widen + true divide, matching x.float()/255.0.
    y = x_ref[...].astype(jnp.float32) / jnp.float32(255.0)
    o_ref[...] = y.astype(o_ref.dtype)


def _cdiv(a, b):
    return -(-a // b)


def _target_out_tile_bytes():
    """Generation-gated output-tile budget (sized against scoped-VMEM defaults)."""
    try:
        kind = jax.devices()[0].device_kind.lower()
    except Exception:  # pragma: no cover - conservative fallback
        kind = ""
    if "v2" in kind or "v3" in kind:
        return 2 << 20          # tiny VMEM parts: stay small
    if "v5 lite" in kind or "v5e" in kind or "v5lite" in kind:
        return 4 << 20          # 16 MiB scoped default, ~0.82 TB/s HBM
    return 8 << 20              # v6e / v7x: 32 MiB scoped default


def _pick_lanes(n_aligned):
    """Widest lane-dense last dim dividing n_aligned (n_aligned % 128 == 0)."""
    for w in (1024, 512, 256, 128):
        if n_aligned % w == 0:
            return w
    return 128


def _choose_block_rows(rows, lanes, out_itemsize, target_out_tile_bytes):
    out_row_bytes = lanes * out_itemsize
    total_out_bytes = rows * out_row_bytes

    # Tiles sized for ~target_out_tile_bytes of output, 32-row aligned
    # (uint8 packs a (32,128) native tile).
    block_rows = max(32, (target_out_tile_bytes // out_row_bytes) // 32 * 32)

    # Guarantee enough grid steps for software pipelining and (on v7x) for
    # both TensorCores: >=4 blocks for >=1 MiB outputs, >=2 for >=256 KiB.
    if total_out_bytes >= (1 << 20):
        cap = max(32, _cdiv(rows, 4) // 32 * 32)
        block_rows = min(block_rows, cap)
    elif total_out_bytes >= (256 << 10):
        cap = max(32, _cdiv(rows, 2) // 32 * 32)
        block_rows = min(block_rows, cap)

    if block_rows >= rows:
        return rows  # single full-extent block (tiny inputs only)

    # Prefer an even number of grid steps so the two v7x TensorCores stay
    # balanced (8-row alignment is the hard layout constraint).
    n = _cdiv(rows, block_rows)
    if n % 2 == 1:
        cand = max(32, _cdiv(_cdiv(rows, n + 1), 8) * 8)
        if _cdiv(rows, cand) % 2 == 0:
            block_rows = cand
    return block_rows


def _normalize_flat_pallas(x_flat, out_dtype):
    """Normalize a 1-D array whose length is a multiple of 128 via Pallas."""
    n = x_flat.shape[0]
    in_itemsize = x_flat.dtype.itemsize
    out_itemsize = jnp.dtype(out_dtype).itemsize

    lanes = _pick_lanes(n)
    rows = n // lanes
    x2d = x_flat.reshape(rows, lanes)

    block_rows = _choose_block_rows(rows, lanes, out_itemsize,
                                    _target_out_tile_bytes())
    grid = (_cdiv(rows, block_rows),)

    # Double-buffered working set (input + output tile) plus headroom; keep at
    # least the 16 MiB everywhere-safe scoped default.
    block_bytes = block_rows * lanes * (in_itemsize + out_itemsize)
    vmem_limit = max(16 << 20, 2 * block_bytes + (4 << 20))

    out2d = pl.pallas_call(
        _normalize_kernel,
        out_shape=jax.ShapeDtypeStruct((rows, lanes), out_dtype),
        grid=grid,
        in_specs=[pl.BlockSpec((block_rows, lanes), lambda i: (i, 0))],
        out_specs=pl.BlockSpec((block_rows, lanes), lambda i: (i, 0)),
        compiler_params=pltpu.CompilerParams(
            dimension_semantics=("parallel",),
            vmem_limit_bytes=vmem_limit),
        cost_estimate=pl.CostEstimate(
            flops=n,
            transcendentals=0,
            bytes_accessed=n * (in_itemsize + out_itemsize)),
    )(x2d)
    return out2d.reshape(n)


def normalize_img(x, *, out_dtype=jnp.float32, min_pallas_bytes=256 << 10):
    """Pallas implementation of NormalizeImg.forward: x.float() / 255.0.

    `out_dtype=jnp.bfloat16` halves HBM write traffic if the consumer allows.
    """
    orig_shape = x.shape
    n_elems = math.prod(orig_shape) if orig_shape else 1
    out_itemsize = jnp.dtype(out_dtype).itemsize

    def _plain(v):
        return v.astype(out_dtype) / jnp.asarray(255.0, dtype=out_dtype)

    # Tiny inputs: pallas_call launch + pipeline prologue dominate; plain XLA
    # fuses the scale into the consumer instead.
    if n_elems * (jnp.dtype(x.dtype).itemsize + out_itemsize) < min_pallas_bytes:
        return _plain(x)

    aligned = (n_elems // 128) * 128
    x_flat = jnp.ravel(x)
    if aligned == n_elems:
        out_flat = _normalize_flat_pallas(x_flat, out_dtype)
    elif aligned == 0:
        return _plain(x)
    else:
        # Aligned prefix through the kernel, <=127-element tail in plain JAX
        # (avoids materializing a padded copy of the whole input).
        head = _normalize_flat_pallas(x_flat[:aligned], out_dtype)
        tail = _plain(x_flat[aligned:])
        out_flat = jnp.concatenate([head, tail])
    return out_flat.reshape(orig_shape)


if __name__ == "__main__":
    key = jax.random.PRNGKey(0)
    k1, k2, k3 = jax.random.split(key, 3)

    # 1) Spec-sized NCHW observation; force the Pallas path for the test.
    x_small = jax.random.randint(k1, (2, 4, 16, 16), 0, 256,
                                 dtype=jnp.int32).astype(jnp.uint8)
    y_small = normalize_img(x_small, min_pallas_bytes=0)

    # 2) Medium batch: exercises the multi-block, double-buffered grid.
    x_med = jax.random.randint(k2, (8, 4, 64, 64), 0, 256,
                               dtype=jnp.int32).astype(jnp.uint8)
    y_med = normalize_img(x_med)

    # 3) Non-multiple-of-128 element count: aligned prefix + plain-JAX tail.
    x_odd = jax.random.randint(k3, (2, 3, 15, 17), 0, 256,
                               dtype=jnp.int32).astype(jnp.uint8)
    y_odd = normalize_img(x_odd, min_pallas_bytes=0)

    jax.block_until_ready((y_small, y_med, y_odd))

    for x, y in ((x_small, y_small), (x_med, y_med), (x_odd, y_odd)):
        ref = x.astype(jnp.float32) / 255.0
        assert y.shape == x.shape, "shape mismatch"
        assert y.dtype == jnp.float32, "dtype mismatch"
        assert jnp.allclose(y, ref, rtol=0.0, atol=1e-6), "mismatch vs reference"

    print("KERNEL_OK")
</pallas_src>

<mosaic_0001>
module attributes {stable_mosaic.version = 11 : i64} {
  func.func @_normalize_kernel(%arg0: i32, %arg1: memref<2x1024xi8, #tpu.memory_space<vmem>>, %arg2: memref<2x1024xf32, #tpu.memory_space<vmem>>) attributes {dimension_semantics = [#tpu.dimension_semantics<parallel>], iteration_bounds = array<i64: 1>, scalar_prefetch = 0 : i64, scratch_operands = 0 : i64, tpu.core_type = #tpu.core_type<tc>, window_params = [{transform_indices = @transform_0, window_bounds = array<i64: 2, 1024>}, {transform_indices = @transform_1, window_bounds = array<i64: 2, 1024>}]} {
    %c0 = arith.constant 0 : index
    %c0_0 = arith.constant 0 : index
    %0 = vector.load %arg1[%c0, %c0_0] : memref<2x1024xi8, #tpu.memory_space<vmem>>, vector<2x1024xi8>
    %1 = arith.uitofp %0 : vector<2x1024xi8> to vector<2x1024xf32>
    %cst = arith.constant 2.550000e+02 : f32
    %2 = vector.broadcast %cst : f32 to vector<2x1024xf32>
    %3 = arith.divf %1, %2 : vector<2x1024xf32>
    %c0_1 = arith.constant 0 : index
    %c0_2 = arith.constant 0 : index
    %4 = vector.load %arg2[%c0_1, %c0_2] : memref<2x1024xf32, #tpu.memory_space<vmem>>, vector<2x1024xf32>
    tpu.vector_store %arg2[%c0_1, %c0_2], %3 {strides = array<i32>} : memref<2x1024xf32, #tpu.memory_space<vmem>>, vector<2x1024xf32>,
    return
  }
  func.func @transform_0(%arg0: i32) -> (i32, i32) {
    %c0_i32 = arith.constant 0 : i32
    %c0_i32_0 = arith.constant 0 : i32
    return %arg0, %c0_i32 : i32, i32
  }
  func.func @transform_1(%arg0: i32) -> (i32, i32) {
    %c0_i32 = arith.constant 0 : i32
    %c0_i32_0 = arith.constant 0 : i32
    return %arg0, %c0_i32 : i32, i32
  }
}

</mosaic_0001>

<llo_original>
// kernel: tpu_custom_call.1
$region0: #{tpu_custom_call.1}
  #allocation0 [shape = 'u32[]', space=smem, size = 0x4, offset = 0x4, fixed_abs, tag = 'smem constant byte address 0x4 - core index']
  #allocation1 [shape = 'u32[72,128]{1,0:T(1,128)}', space=vmem, size = 0x9000, scoped, tag = 'internal scratch']
  %s0 = inlined_call_operand.hbm [shape: u8[2,1024], index: 0, kind: input, shape index: {}]
  %s1 = inlined_call_operand.hbm [shape: f32[2,1024], index: 1, kind: output, shape index: {}]
  %s2 = sld [smem:[#allocation0]]
  $region18: #{tpu_custom_call.1} parent=0
    _
  %s4 = ssub.s32 1, %s2
  %s5 = scalar_select 0, %s4, %s2
  $region1: #{tpu_custom_call.1} parent=0
    #allocation2 [shape = 'u8[4096]{0}', space=vmem, size = 0x1000, scoped, tag = 'input window, operand 0, single buffered']
    #allocation3 [shape = 's32[1]{0}', space=sflag, size = 0x4, scoped, tag = 'scoped memory for tpu_custom_call.1']
    #allocation4 [shape = 's32[1]{0}', space=sflag, size = 0x4, scoped, tag = 'scoped memory for tpu_custom_call.1']
    #allocation5 [shape = 'u8[8192]{0}', space=vmem, size = 0x2000, scoped, tag = 'output window, operand 0, single buffered']
    %6 = vsyncpa [#allocation3], 0
    %7 = vsyncpa [#allocation4], 0
    // Predicated region
    $region2: #{tpu_custom_call.1} parent=1 // pred_check
      _
    $region3: #{tpu_custom_call.1} parent=1 // pred_check_branch
      %9 = sbr.rel (0) target = $region5
    $region4: #{tpu_custom_call.1} parent=1 // pred_region
      %11 = vsyncadd [#allocation3], 0
      %s13 = sshll.u32 %s0, 4
      %s14 = int_to_ptr.hbm [resolvable:$true] %s13
      %s15 = sshll.u32 [#allocation2], 4
      %s16 = int_to_ptr.vmem [resolvable:$true] %s15
      %18 = dma.hbm_to_vmem [thread:$0]  %s14, 128, %s16, [#allocation3]
    $region5: #{tpu_custom_call.1} parent=1 // pred_fallthru
      _
    // Predicated region
    $region6: #{tpu_custom_call.1} parent=1 // pred_check
      _
    $region7: #{tpu_custom_call.1} parent=1 // pred_check_branch
      %20 = sbr.rel (0) target = $region9
    $region8: #{tpu_custom_call.1} parent=1 // pred_region
      %22 = dma.done [#allocation3], 128
    $region9: #{tpu_custom_call.1} parent=1 // pred_fallthru
      _
    %v23 = vld [vmem:[#allocation2] sm:$0xff]
    %v24 = vunpack.c.0.s8 %v23
    %v25 = vunpack.c.1.s8 %v23
    %v26 = vunpack.c.2.s8 %v23
    %v27 = vunpack.c.3.s8 %v23
    %v28 = vand.u32 %v24, 255
    %v29 = vand.u32 %v25, 255
    %v30 = vand.u32 %v26, 255
    %v31 = vand.u32 %v27, 255
    %v32 = vcvt.s32.f32 %v28
    %v33 = vcvt.s32.f32 %v29
    %v34 = vcvt.s32.f32 %v30
    %v35 = vcvt.s32.f32 %v31
    %v36 = vrcp.pop 255.0
    %v37 = vmul.f32 255.0, %v36
    %v38 = vsub.f32 1.0, %v37
    %v39 = vmul.f32 %v36, %v38
    %v40 = vadd.f32 %v36, %v39
    %vm41 = vweird.f32 %v36
    %v42 = vsel %vm41, %v36, %v40
    %v43 = vmul.f32 %v32, %v42
    %v44 = vmul.f32 %v33, %v42
    %v45 = vmul.f32 %v34, %v42
    %v46 = vmul.f32 %v35, %v42
    %v51 = vrot.slane %v43, 2
    %v52 = vrot.slane %v44, 4
    %v53 = vrot.slane %v44, 6
    %v54 = vrot.slane %v45, 2
    %v55 = vrot.slane %v46, 4
    %v56 = vrot.slane %v46, 6
    %vm57 = vcmask 1041408
    %v58 = vsel %vm57, %v43, %v51
    %vm59 = vcmask 1045508
    %v60 = vsel %vm59, %v52, %v53
    %vm61 = vcmask 1043456
    %v62 = vsel %vm61, %v58, %v60
    %v63 = vsel %vm57, %v45, %v54
    %v64 = vsel %vm59, %v55, %v56
    %v65 = vsel %vm61, %v63, %v64
    %68 = vst [vmem:[#allocation5] sm:$0xff] %v62
    %69 = vst [vmem:[#allocation5 + $0x8] sm:$0xff] %v65
    // Predicated region
    $region10: #{tpu_custom_call.1} parent=1 // pred_check
      _
    $region11: #{tpu_custom_call.1} parent=1 // pred_check_branch
      %71 = sbr.rel (0) target = $region13
    $region12: #{tpu_custom_call.1} parent=1 // pred_region
      %73 = vsyncadd [#allocation4], 0
      %s75 = sshll.u32 [#allocation5], 4
      %s76 = int_to_ptr.vmem [resolvable:$true] %s75
      %s77 = sshll.u32 %s1, 4
      %s78 = int_to_ptr.hbm [resolvable:$true] %s77
      %80 = dma.vmem_to_hbm [thread:$0]  %s76, 256, %s78, [#allocation4]
    $region13: #{tpu_custom_call.1} parent=1 // pred_fallthru
      _
    // Predicated region
    $region14: #{tpu_custom_call.1} parent=1 // pred_check
      _
    $region15: #{tpu_custom_call.1} parent=1 // pred_check_branch
      %82 = sbr.rel (0) target = $region17
    $region16: #{tpu_custom_call.1} parent=1 // pred_region
      %84 = dma.done [#allocation4], 256
    $region17: #{tpu_custom_call.1} parent=1 // pred_fallthru
      _
    %85 = vsyncpa [#allocation3], 1
    %86 = vsyncpa [#allocation4], 1

</llo_original>
